<compile_context>
chip_gen: v6e
topology: v6e:2x2x1
jax: 0.10.0
libtpu: 0.0.40
codegen_flags: <defaults>
</compile_context>

<pallas_src>
import math
import numpy as np
import jax
import jax.numpy as jnp
from jax.experimental import pallas as pl
from jax.experimental.pallas import tpu as pltpu


def _nearest_src_indices(out_size: int, in_size: int) -> np.ndarray:
    # PyTorch 'nearest' (legacy) rule: src = floor(dst * in / out), clamped.
    idx = np.floor(np.arange(out_size, dtype=np.float64) * (in_size / out_size))
    return np.minimum(idx.astype(np.int64), in_size - 1)


def _largest_divisor_leq(n: int, k: int) -> int:
    k = max(1, min(n, k))
    for d in range(k, 0, -1):
        if n % d == 0:
            return d
    return 1


def _make_upsample_kernel(tc, H, W, H_out, W_out, w_first, cdtype):
    def kernel(x_ref, sh_ref, swt_ref, o_ref):
        # x_ref:   (tc, H, W)       batch of planes
        # sh_ref:  (H_out, H)       one-hot row-selection matrix
        # swt_ref: (W, W_out)       one-hot col-selection matrix (transposed)
        # o_ref:   (tc, H_out, W_out)
        x = x_ref[...].astype(cdtype)     # no-op cast for float inputs
        sh = sh_ref[...]
        swt = swt_ref[...]
        if w_first:
            # Batched W (lane) gather: single MXU matmul with M = tc*H.
            t = jnp.dot(x.reshape(tc * H, W), swt,
                        preferred_element_type=jnp.float32)
            t = t.reshape(tc, H, W_out).astype(cdtype)   # exact (one-hot select)
            # Per-plane H (row) gather, small static unroll.
            for c in range(tc):
                y = jnp.dot(sh, t[c], preferred_element_type=jnp.float32)
                o_ref[c] = y.astype(o_ref.dtype)
        else:
            # Per-plane H (row) gather first (smaller intermediate) ...
            rows = [
                jnp.dot(sh, x[c], preferred_element_type=jnp.float32).astype(cdtype)
                for c in range(tc)
            ]
            t = jnp.concatenate(rows, axis=0)            # (tc*H_out, W)
            # ... then one batched W gather with M = tc*H_out.
            y = jnp.dot(t, swt, preferred_element_type=jnp.float32)
            o_ref[...] = y.reshape(tc, H_out, W_out).astype(o_ref.dtype)

    return kernel


def upsample_nearest2d(x, size=None, scale_factor=None):
    """Equivalent of F.interpolate(x, size=size, scale_factor=scale_factor,
    mode='nearest') for a 4-D NCHW tensor."""
    N, C, H, W = x.shape
    if size is not None:
        if isinstance(size, (tuple, list)):
            H_out, W_out = int(size[0]), int(size[1])
        else:
            H_out = W_out = int(size)
    else:
        if isinstance(scale_factor, (tuple, list)):
            sh_f, sw_f = float(scale_factor[0]), float(scale_factor[1])
        else:
            sh_f = sw_f = float(scale_factor)
        H_out = int(math.floor(H * sh_f))
        W_out = int(math.floor(W * sw_f))

    P = N * C

    if jnp.issubdtype(x.dtype, jnp.floating):
        cdtype = x.dtype
    else:
        # TODO(synk): integer inputs with |v| >= 2**24 lose exactness through a
        # float32 one-hot matmul; a DMA-gather path would be needed for those.
        cdtype = jnp.float32

    # One-hot selection matrices in the compute dtype (selection is exact).
    src_h = _nearest_src_indices(H_out, H)
    src_w = _nearest_src_indices(W_out, W)
    sh_np = np.zeros((H_out, H), dtype=np.float32)
    sh_np[np.arange(H_out), src_h] = 1.0
    swt_np = np.zeros((W, W_out), dtype=np.float32)
    swt_np[src_w, np.arange(W_out)] = 1.0
    sh = jnp.asarray(sh_np, dtype=cdtype)
    swt = jnp.asarray(swt_np, dtype=cdtype)

    # Pick the contraction order with fewer MXU flops / smaller intermediate.
    flops_w_first = H * W * W_out + H * W_out * H_out      # per plane (x0.5)
    flops_h_first = H * W * H_out + H_out * W * W_out
    w_first = flops_w_first <= flops_h_first

    # Choose TC (planes per grid step) from a conservative VMEM budget
    # (safe on v5e/v6e and v7x's 64 MiB VMEM), keep >= 2 grid steps (megacore).
    esize = jnp.dtype(x.dtype).itemsize
    csize = jnp.dtype(cdtype).itemsize
    inter_elems = min(H * W_out, H_out * W)
    per_plane_bytes = (
        2 * H * W * esize                     # double-buffered input block
        + 2 * H_out * W_out * esize           # double-buffered output block
        + 4 * (inter_elems + H_out * W_out)   # f32 intermediates
        + csize * (H * W + H_out * W_out)     # compute-dtype copies
    )
    sel_bytes = 2 * (H_out * H + W * W_out) * csize
    budget = 12 * 1024 * 1024
    tc_cap = max(1, (budget - sel_bytes) // max(per_plane_bytes, 1))
    tc_cap = min(tc_cap, 16)                  # bound the static in-kernel unroll
    tc = _largest_divisor_leq(P, tc_cap)
    if P >= 2 and P // tc < 2:
        tc = _largest_divisor_leq(P, P // 2)  # ensure >= 2 parallel grid steps
    grid = (P // tc,)

    x_flat = x.reshape(P, H, W)

    flops = 2 * P * (flops_w_first if w_first else flops_h_first)
    bytes_accessed = (P * H * W + P * H_out * W_out) * esize \
        + (H_out * H + W * W_out) * csize

    out_flat = pl.pallas_call(
        _make_upsample_kernel(tc, H, W, H_out, W_out, w_first, cdtype),
        out_shape=jax.ShapeDtypeStruct((P, H_out, W_out), x.dtype),
        grid_spec=pltpu.PrefetchScalarGridSpec(
            num_scalar_prefetch=0,
            grid=grid,
            in_specs=[
                pl.BlockSpec((tc, H, W), lambda i: (i, 0, 0)),
                pl.BlockSpec((H_out, H), lambda i: (0, 0)),
                pl.BlockSpec((W, W_out), lambda i: (0, 0)),
            ],
            out_specs=pl.BlockSpec((tc, H_out, W_out), lambda i: (i, 0, 0)),
        ),
        compiler_params=pltpu.CompilerParams(
            dimension_semantics=("parallel",),
            vmem_limit_bytes=32 * 1024 * 1024,
        ),
        cost_estimate=pl.CostEstimate(
            flops=int(flops),
            transcendentals=0,
            bytes_accessed=int(bytes_accessed),
        ),
    )(x_flat, sh, swt)

    return out_flat.reshape(N, C, H_out, W_out)


def _reference_upsample(x, H_out, W_out):
    N, C, H, W = x.shape
    src_h = jnp.asarray(_nearest_src_indices(H_out, H))
    src_w = jnp.asarray(_nearest_src_indices(W_out, W))
    return x[:, :, src_h, :][:, :, :, src_w]


if __name__ == "__main__":
    key = jax.random.PRNGKey(0)
    x = jax.random.normal(key, (2, 4, 16, 16), dtype=jnp.float32)

    # Case 1: scale_factor=2.0 (like Interpolate(size=None, scale_factor=2.0))
    y1 = upsample_nearest2d(x, size=None, scale_factor=2.0)
    jax.block_until_ready(y1)
    ref1 = _reference_upsample(x, 32, 32)
    assert y1.shape == (2, 4, 32, 32)
    np.testing.assert_allclose(np.asarray(y1), np.asarray(ref1), rtol=0, atol=0)

    # Case 2: explicit size (like Interpolate(size=(24, 40), scale_factor=None))
    y2 = upsample_nearest2d(x, size=(24, 40), scale_factor=None)
    jax.block_until_ready(y2)
    ref2 = _reference_upsample(x, 24, 40)
    assert y2.shape == (2, 4, 24, 40)
    np.testing.assert_allclose(np.asarray(y2), np.asarray(ref2), rtol=0, atol=0)

    print("KERNEL_OK")
</pallas_src>

<mosaic_0001>
module attributes {stable_mosaic.version = 11 : i64} {
  func.func @kernel(%arg0: i32, %arg1: memref<4x16x16xf32, #tpu.memory_space<vmem>>, %arg2: memref<32x16xf32, #tpu.memory_space<vmem>>, %arg3: memref<16x32xf32, #tpu.memory_space<vmem>>, %arg4: memref<4x32x32xf32, #tpu.memory_space<vmem>>) attributes {dimension_semantics = [#tpu.dimension_semantics<parallel>], iteration_bounds = array<i64: 2>, scalar_prefetch = 0 : i64, scratch_operands = 0 : i64, tpu.core_type = #tpu.core_type<tc>, window_params = [{transform_indices = @transform_0, window_bounds = array<i64: 4, 16, 16>}, {pipeline_mode = #tpu.pipeline_mode<synchronous>, transform_indices = @transform_1, window_bounds = array<i64: 32, 16>}, {pipeline_mode = #tpu.pipeline_mode<synchronous>, transform_indices = @transform_2, window_bounds = array<i64: 16, 32>}, {transform_indices = @transform_3, window_bounds = array<i64: 4, 32, 32>}]} {
    %c0 = arith.constant 0 : index
    %c0_0 = arith.constant 0 : index
    %c0_1 = arith.constant 0 : index
    %0 = vector.load %arg1[%c0, %c0_0, %c0_1] : memref<4x16x16xf32, #tpu.memory_space<vmem>>, vector<4x16x16xf32>
    %c0_2 = arith.constant 0 : index
    %c0_3 = arith.constant 0 : index
    %1 = vector.load %arg2[%c0_2, %c0_3] : memref<32x16xf32, #tpu.memory_space<vmem>>, vector<32x16xf32>
    %c0_4 = arith.constant 0 : index
    %c0_5 = arith.constant 0 : index
    %2 = vector.load %arg3[%c0_4, %c0_5] : memref<16x32xf32, #tpu.memory_space<vmem>>, vector<16x32xf32>
    %3 = vector.shape_cast %0 : vector<4x16x16xf32> to vector<64x16xf32>
    %cst = arith.constant dense<0.000000e+00> : vector<64x32xf32>
    %4 = tpu.matmul %3, %2, %cst {dimension_numbers = #tpu.dot_dimension_numbers<[1], [0], [0], [1], [0, 0, 1, 1], [], []>} : vector<64x16xf32>, vector<16x32xf32>, vector<64x32xf32> -> vector<64x32xf32>
    %5 = vector.shape_cast %4 : vector<64x32xf32> to vector<4x16x32xf32>
    %6 = vector.extract_strided_slice %5 {offsets = [0, 0, 0], sizes = [1, 16, 32], strides = [1, 1, 1]} : vector<4x16x32xf32> to vector<1x16x32xf32>
    %7 = vector.shape_cast %6 : vector<1x16x32xf32> to vector<16x32xf32>
    %cst_6 = arith.constant dense<0.000000e+00> : vector<32x32xf32>
    %8 = tpu.matmul %1, %7, %cst_6 {dimension_numbers = #tpu.dot_dimension_numbers<[1], [0], [0], [1], [0, 0, 1, 1], [], []>} : vector<32x16xf32>, vector<16x32xf32>, vector<32x32xf32> -> vector<32x32xf32>
    %c0_7 = arith.constant 0 : index
    %c0_8 = arith.constant 0 : index
    %c0_9 = arith.constant 0 : index
    %9 = vector.load %arg4[%c0_7, %c0_8, %c0_9] : memref<4x32x32xf32, #tpu.memory_space<vmem>>, vector<1x32x32xf32>
    %10 = vector.shape_cast %9 : vector<1x32x32xf32> to vector<32x32xf32>
    %11 = vector.shape_cast %8 : vector<32x32xf32> to vector<1x32x32xf32>
    tpu.vector_store %arg4[%c0_7, %c0_8, %c0_9], %11 {strides = array<i32>} : memref<4x32x32xf32, #tpu.memory_space<vmem>>, vector<1x32x32xf32>,
    %12 = vector.extract_strided_slice %5 {offsets = [1, 0, 0], sizes = [1, 16, 32], strides = [1, 1, 1]} : vector<4x16x32xf32> to vector<1x16x32xf32>
    %13 = vector.shape_cast %12 : vector<1x16x32xf32> to vector<16x32xf32>
    %cst_10 = arith.constant dense<0.000000e+00> : vector<32x32xf32>
    %14 = tpu.matmul %1, %13, %cst_10 {dimension_numbers = #tpu.dot_dimension_numbers<[1], [0], [0], [1], [0, 0, 1, 1], [], []>} : vector<32x16xf32>, vector<16x32xf32>, vector<32x32xf32> -> vector<32x32xf32>
    %c1 = arith.constant 1 : index
    %c0_11 = arith.constant 0 : index
    %c0_12 = arith.constant 0 : index
    %15 = vector.load %arg4[%c1, %c0_11, %c0_12] : memref<4x32x32xf32, #tpu.memory_space<vmem>>, vector<1x32x32xf32>
    %16 = vector.shape_cast %15 : vector<1x32x32xf32> to vector<32x32xf32>
    %17 = vector.shape_cast %14 : vector<32x32xf32> to vector<1x32x32xf32>
    tpu.vector_store %arg4[%c1, %c0_11, %c0_12], %17 {strides = array<i32>} : memref<4x32x32xf32, #tpu.memory_space<vmem>>, vector<1x32x32xf32>,
    %18 = vector.extract_strided_slice %5 {offsets = [2, 0, 0], sizes = [1, 16, 32], strides = [1, 1, 1]} : vector<4x16x32xf32> to vector<1x16x32xf32>
    %19 = vector.shape_cast %18 : vector<1x16x32xf32> to vector<16x32xf32>
    %cst_13 = arith.constant dense<0.000000e+00> : vector<32x32xf32>
    %20 = tpu.matmul %1, %19, %cst_13 {dimension_numbers = #tpu.dot_dimension_numbers<[1], [0], [0], [1], [0, 0, 1, 1], [], []>} : vector<32x16xf32>, vector<16x32xf32>, vector<32x32xf32> -> vector<32x32xf32>
    %c2 = arith.constant 2 : index
    %c0_14 = arith.constant 0 : index
    %c0_15 = arith.constant 0 : index
    %21 = vector.load %arg4[%c2, %c0_14, %c0_15] : memref<4x32x32xf32, #tpu.memory_space<vmem>>, vector<1x32x32xf32>
    %22 = vector.shape_cast %21 : vector<1x32x32xf32> to vector<32x32xf32>
    %23 = vector.shape_cast %20 : vector<32x32xf32> to vector<1x32x32xf32>
    tpu.vector_store %arg4[%c2, %c0_14, %c0_15], %23 {strides = array<i32>} : memref<4x32x32xf32, #tpu.memory_space<vmem>>, vector<1x32x32xf32>,
    %24 = vector.extract_strided_slice %5 {offsets = [3, 0, 0], sizes = [1, 16, 32], strides = [1, 1, 1]} : vector<4x16x32xf32> to vector<1x16x32xf32>
    %25 = vector.shape_cast %24 : vector<1x16x32xf32> to vector<16x32xf32>
    %cst_16 = arith.constant dense<0.000000e+00> : vector<32x32xf32>
    %26 = tpu.matmul %1, %25, %cst_16 {dimension_numbers = #tpu.dot_dimension_numbers<[1], [0], [0], [1], [0, 0, 1, 1], [], []>} : vector<32x16xf32>, vector<16x32xf32>, vector<32x32xf32> -> vector<32x32xf32>
    %c3 = arith.constant 3 : index
    %c0_17 = arith.constant 0 : index
    %c0_18 = arith.constant 0 : index
    %27 = vector.load %arg4[%c3, %c0_17, %c0_18] : memref<4x32x32xf32, #tpu.memory_space<vmem>>, vector<1x32x32xf32>
    %28 = vector.shape_cast %27 : vector<1x32x32xf32> to vector<32x32xf32>
    %29 = vector.shape_cast %26 : vector<32x32xf32> to vector<1x32x32xf32>
    tpu.vector_store %arg4[%c3, %c0_17, %c0_18], %29 {strides = array<i32>} : memref<4x32x32xf32, #tpu.memory_space<vmem>>, vector<1x32x32xf32>,
    return
  }
  func.func @transform_0(%arg0: i32) -> (i32, i32, i32) {
    %c0_i32 = arith.constant 0 : i32
    %c0_i32_0 = arith.constant 0 : i32
    %c0_i32_1 = arith.constant 0 : i32
    return %arg0, %c0_i32, %c0_i32_0 : i32, i32, i32
  }
  func.func @transform_1(%arg0: i32) -> (i32, i32) {
    %c0_i32 = arith.constant 0 : i32
    %c0_i32_0 = arith.constant 0 : i32
    %c0_i32_1 = arith.constant 0 : i32
    return %c0_i32, %c0_i32_0 : i32, i32
  }
  func.func @transform_2(%arg0: i32) -> (i32, i32) {
    %c0_i32 = arith.constant 0 : i32
    %c0_i32_0 = arith.constant 0 : i32
    %c0_i32_1 = arith.constant 0 : i32
    return %c0_i32, %c0_i32_0 : i32, i32
  }
  func.func @transform_3(%arg0: i32) -> (i32, i32, i32) {
    %c0_i32 = arith.constant 0 : i32
    %c0_i32_0 = arith.constant 0 : i32
    %c0_i32_1 = arith.constant 0 : i32
    return %arg0, %c0_i32, %c0_i32_0 : i32, i32, i32
  }
}

</mosaic_0001>

<llo_original>
// kernel: tpu_custom_call.1
$region0: #{tpu_custom_call.1}
  #allocation0 [shape = 'u32[]', space=smem, size = 0x4, offset = 0x4, fixed_abs, tag = 'smem constant byte address 0x4 - core index']
  #allocation1 [shape = 'u32[144,128]{1,0:T(1,128)}', space=vmem, size = 0x12000, scoped, tag = 'internal scratch']
  %s0 = inlined_call_operand.hbm [shape: f32[8,16,16], index: 0, kind: input, shape index: {}]
  %s1 = inlined_call_operand.vmem [shape: f32[32,16], index: 1, kind: input, shape index: {}]
  %s2 = inlined_call_operand.vmem [shape: f32[16,32], index: 2, kind: input, shape index: {}]
  %s3 = inlined_call_operand.hbm [shape: f32[8,32,32], index: 3, kind: output, shape index: {}]
  %s4 = sld [smem:[#allocation0]]
  $region49: #{tpu_custom_call.1} parent=0
    _
  %s6 = ssub.s32 1, %s4
  %s7 = scalar_select 0, %s6, %s4
  $region1: #{tpu_custom_call.1} parent=0
    #allocation2 [shape = 'u8[65536]{0}', space=vmem, size = 0x10000, scoped, tag = 'input window, operand 0']
    #allocation3 [shape = 's32[2]{0}', space=sflag, size = 0x8, scoped, tag = 'scoped memory for tpu_custom_call.1']
    #allocation4 [shape = 's32[2]{0}', space=sflag, size = 0x8, scoped, tag = 'scoped memory for tpu_custom_call.1']
    #allocation5 [shape = 'u8[131072]{0}', space=vmem, size = 0x20000, scoped, tag = 'output window, operand 0']
    %8 = vsyncpa [#allocation3], 0
    %s9 = scalar_lea.sflag [#allocation3], 1
    %10 = vsyncpa %s9, 0
    %11 = vsyncpa [#allocation4], 0
    %s12 = scalar_lea.sflag [#allocation4], 1
    %13 = vsyncpa %s12, 0
    loop: start=0, step=1, limit=4
    $region2: #{tpu_custom_call.1} parent=1 // loop_pre_header
      _
    $region3: #{tpu_custom_call.1} parent=1 // loop_header
      %s15 = sphi 0, %s19
      %p16 = scmp.ge.s32.totalorder %s15, 4
      %s25 = sphi 0, %s27
      %s28 = sphi 0, %s25
      %s29 = sphi 0, %s28
      %s45 = sphi 0, %s29
      %s49 = sphi 0, %s49
      %s51 = sphi 0, %s49
      %s52 = sphi 0, %s51
      %s66 = sphi 0, %s52
      %s70 = sphi 0, %s70
      %s72 = sphi 0, %s70
      %s73 = sphi 0, %s72
      %s87 = sphi 0, %s73
      %s93 = sphi 0, %s95
      %s96 = sphi 0, %s93
      %s97 = sphi 0, %s96
      %s113 = sphi 0, %s97
    $region4: #{tpu_custom_call.1} parent=1 // loop_header_branch
      %18 = sbr.rel (%p16) target = $region8
    $region5: #{tpu_custom_call.1} parent=1 // loop_body
      %s20 = ssub.s32 %s15, 1
      %s21 = ssub.s32 %s15, 2
      %s22 = sadd.s32 %s15, 1
      %s23 = ssub.s32 %s15, %s22
      %p24 = scmp.eq.s32.totalorder %s23, 0
      %s26 = sadd.s32 %s25, 1
      %s27 = scalar_select %p24, %s25, %s26
      %p30 = pneg %p24
      %p31 = scmp.eq.s32.totalorder %s15, 1
      %p32 = por %p30, %p31
      %p33 = scmp.ne.s32.totalorder %s25, %s28
      %p34 = scmp.eq.s32.totalorder %s15, 0
      %p35 = por %p33, %p34
      %p36 = scmp.ne.s32.totalorder %s25, %s28
      %p37 = scmp.eq.s32.totalorder %s20, 1
      %p38 = por %p36, %p37
      %p39 = scmp.ne.s32.totalorder %s28, %s29
      %p40 = scmp.eq.s32.totalorder %s20, 0
      %p41 = por %p39, %p40
      %p42 = scmp.ne.s32.totalorder %s28, %s29
      %p43 = scmp.eq.s32.totalorder %s21, 1
      %p44 = por %p42, %p43
      %p46 = scmp.ne.s32.totalorder %s29, %s45
      %p47 = scmp.eq.s32.totalorder %s21, 0
      %p48 = por %p46, %p47
      %s50 = sadd.s32 %s49, 1
      %p53 = scmp.eq.s32.totalorder %s15, 1
      %p54 = scmp.ne.s32.totalorder %s49, %s51
      %p55 = scmp.eq.s32.totalorder %s15, 0
      %p56 = por %p54, %p55
      %p57 = scmp.ne.s32.totalorder %s49, %s51
      %p58 = scmp.eq.s32.totalorder %s20, 1
      %p59 = por %p57, %p58
      %p60 = scmp.ne.s32.totalorder %s51, %s52
      %p61 = scmp.eq.s32.totalorder %s20, 0
      %p62 = por %p60, %p61
      %p63 = scmp.ne.s32.totalorder %s51, %s52
      %p64 = scmp.eq.s32.totalorder %s21, 1
      %p65 = por %p63, %p64
      %p67 = scmp.ne.s32.totalorder %s52, %s66
      %p68 = scmp.eq.s32.totalorder %s21, 0
      %p69 = por %p67, %p68
      %s71 = sadd.s32 %s70, 1
      %p74 = scmp.eq.s32.totalorder %s15, 1
      %p75 = scmp.ne.s32.totalorder %s70, %s72
      %p76 = scmp.eq.s32.totalorder %s15, 0
      %p77 = por %p75, %p76
      %p78 = scmp.ne.s32.totalorder %s70, %s72
      %p79 = scmp.eq.s32.totalorder %s20, 1
      %p80 = por %p78, %p79
      %p81 = scmp.ne.s32.totalorder %s72, %s73
      %p82 = scmp.eq.s32.totalorder %s20, 0
      %p83 = por %p81, %p82
      %p84 = scmp.ne.s32.totalorder %s72, %s73
      %p85 = scmp.eq.s32.totalorder %s21, 1
      %p86 = por %p84, %p85
      %p88 = scmp.ne.s32.totalorder %s73, %s87
      %p89 = scmp.eq.s32.totalorder %s21, 0
      %p90 = por %p88, %p89
      %s91 = ssub.s32 %s15, %s22
      %p92 = scmp.eq.s32.totalorder %s91, 0
      %s94 = sadd.s32 %s93, 1
      %s95 = scalar_select %p92, %s93, %s94
      %p98 = pneg %p92
      %p99 = scmp.eq.s32.totalorder %s15, 1
      %p100 = por %p98, %p99
      %p101 = scmp.ne.s32.totalorder %s93, %s96
      %p102 = scmp.eq.s32.totalorder %s15, 0
      %p103 = por %p101, %p102
      %p104 = scmp.ne.s32.totalorder %s93, %s96
      %p105 = scmp.eq.s32.totalorder %s20, 1
      %p106 = por %p104, %p105
      %p107 = scmp.ne.s32.totalorder %s96, %s97
      %p108 = scmp.eq.s32.totalorder %s20, 0
      %p109 = por %p107, %p108
      %p110 = scmp.ne.s32.totalorder %s96, %s97
      %p111 = scmp.eq.s32.totalorder %s21, 1
      %p112 = por %p110, %p111
      %p114 = scmp.ne.s32.totalorder %s97, %s113
      %p115 = scmp.eq.s32.totalorder %s21, 0
      %p116 = por %p114, %p115
      %p117 = scmp.le.s32.totalorder 1, %s15
      %p118 = scmp.lt.s32.totalorder %s15, 3
      %p119 = pnand %p117, %p118
      %p120 = pneg %p119
      // Predicated region
      $region9: #{tpu_custom_call.1} parent=5 // pred_check
        _
      $region10: #{tpu_custom_call.1} parent=5 // pred_check_branch
        %122 = sbr.rel (%p119) target = $region12
      $region11: #{tpu_custom_call.1} parent=5 // pred_region
        %s123 = ssub.s32 %s15, 1
        // Predicated region
        $region13: #{tpu_custom_call.1} parent=11 // pred_check
          %p124 = pneg %p62
        $region14: #{tpu_custom_call.1} parent=11 // pred_check_branch
          %126 = sbr.rel (%p124) target = $region16
        $region15: #{tpu_custom_call.1} parent=11 // pred_region
          _
        $region16: #{tpu_custom_call.1} parent=11 // pred_fallthru
          _
        // Predicated region
        $region17: #{tpu_custom_call.1} parent=11 // pred_check
          %p127 = pneg %p83
        $region18: #{tpu_custom_call.1} parent=11 // pred_check_branch
          %129 = sbr.rel (%p127) target = $region20
        $region19: #{tpu_custom_call.1} parent=11 // pred_region
          _
        $region20: #{tpu_custom_call.1} parent=11 // pred_fallthru
          _
      $region12: #{tpu_custom_call.1} parent=5 // pred_fallthru
        _
      %p130 = scmp.lt.s32.totalorder %s15, 2
      // Predicated region
      $region21: #{tpu_custom_call.1} parent=5 // pred_check
        %p131 = pneg %p130
      $region22: #{tpu_custom_call.1} parent=5 // pred_check_branch
        %133 = sbr.rel (%p131) target = $region24
      $region23: #{tpu_custom_call.1} parent=5 // pred_region
        // Predicated region
        $region25: #{tpu_custom_call.1} parent=23 // pred_check
          %p134 = pneg %p35
        $region26: #{tpu_custom_call.1} parent=23 // pred_check_branch
          %136 = sbr.rel (%p134) target = $region28
        $region27: #{tpu_custom_call.1} parent=23 // pred_region
          %s137 = sand.u32 %s25, 1
          %s138 = scalar_lea.sflag [#allocation3], %s137
          %s139 = sand.u32 %s25, 1
          %s140 = smul.addr %s139, 64
          %s141 = scalar_lea.vmem [#allocation2], %s140
          %s142 = smul.u32 4, %s15
          %s144 = ssub.s32 1024, 1024
          %145 = vsyncadd %s138, %s144
          %s146 = smul.addr %s142, 2
          %s147 = smul.addr %s146, 128
          %s148 = scalar_lea.hbm %s0, %s147
          %s149 = sshll.u32 %s141, 4
          %s150 = int_to_ptr.vmem [resolvable:$true] %s149
          %155 = dma.hbm_to_vmem [thread:$0]  %s148, 1024, %s150, %s138, 128, 128, 8
        $region28: #{tpu_custom_call.1} parent=23 // pred_fallthru
          _
      $region24: #{tpu_custom_call.1} parent=5 // pred_fallthru
        _
      %p156 = scmp.le.s32.totalorder 1, %s15
      %p157 = scmp.lt.s32.totalorder %s15, 3
      %p158 = pnand %p156, %p157
      %p159 = pneg %p158
      // Predicated region
      $region29: #{tpu_custom_call.1} parent=5 // pred_check
        _
      $region30: #{tpu_custom_call.1} parent=5 // pred_check_branch
        %161 = sbr.rel (%p158) target = $region32
      $region31: #{tpu_custom_call.1} parent=5 // pred_region
        %s162 = ssub.s32 %s15, 1
        %s163 = sand.u32 %s28, 1
        %s164 = scalar_lea.sflag [#allocation3], %s163
        %s165 = sand.u32 %s28, 1
        %s166 = smul.addr %s165, 64
        %s167 = scalar_lea.vmem [#allocation2], %s166
        // Predicated region
        $region33: #{tpu_custom_call.1} parent=31 // pred_check
          %p168 = pneg %p41
        $region34: #{tpu_custom_call.1} parent=31 // pred_check_branch
          %170 = sbr.rel (%p168) target = $region36
        $region35: #{tpu_custom_call.1} parent=31 // pred_region
          %171 = dma.done %s164, 1024
        $region36: #{tpu_custom_call.1} parent=31 // pred_fallthru
          _
        %s172 = sand.u32 %s28, 1
        %s173 = scalar_lea.sflag [#allocation3], %s172
        %s174 = sand.u32 %s28, 1
        %s175 = smul.addr %s174, 64
        %s176 = scalar_lea.vmem [#allocation2], %s175
        %p177 = pneg %p41
        %p178 = pneg %p38
        %p179 = pneg %p62
        %p180 = pneg %p59
        %p181 = pneg %p83
        %p182 = pneg %p80
        %p183 = pneg %p109
        %p184 = pneg %p106
        %s185 = sand.u32 %s96, 1
        %s186 = scalar_lea.sflag [#allocation4], %s185
        %s187 = sand.u32 %s96, 1
        %s188 = smul.addr %s187, 128
        %s189 = scalar_lea.vmem [#allocation5], %s188
        %s190 = smul.u32 4, %s20
        %s191 = smul.u32 4, %s20
        %v192 = vld [vmem:[%s167] sm:$0xff]
        %v193 = vld [vmem:[%s167 + $0x8] sm:$0xff]
        %v194 = vld [vmem:[%s167 + $0x10] sm:$0xff]
        %v195 = vld [vmem:[%s167 + $0x18] sm:$0xff]
        %v196 = vld [vmem:[%s167 + $0x20] sm:$0xff]
        %v197 = vld [vmem:[%s167 + $0x28] sm:$0xff]
        %v198 = vld [vmem:[%s167 + $0x30] sm:$0xff]
        %v199 = vld [vmem:[%s167 + $0x38] sm:$0xff]
        %v200 = vld [vmem:[%s1] sm:$0xff]
        %v201 = vld [vmem:[%s1 + $0x8] sm:$0xff]
        %v202 = vld [vmem:[%s1 + $0x10] sm:$0xff]
        %v203 = vld [vmem:[%s1 + $0x18] sm:$0xff]
        %v204 = vld [vmem:[%s2] sm:$0xff]
        %v205 = vld [vmem:[%s2 + $0x8] sm:$0xff]
        %vm206 = vcmask 130048
        %v208 = vsel %vm206, %v192, 0
        %v211 = vsel %vm206, %v193, 0
        %v214 = vsel %vm206, %v194, 0
        %v217 = vsel %vm206, %v195, 0
        %v220 = vsel %vm206, %v196, 0
        %v223 = vsel %vm206, %v197, 0
        %v226 = vsel %vm206, %v198, 0
        %v229 = vsel %vm206, %v199, 0
        %231 = vmatprep.subr.mxu0 0.0
        %232 = vmatpush1.msra.mxu0 0.0
        %233 = vmatprep.subr.mxu0 0.0
        %234 = vmatpush1.msra.mxu0 0.0
        %235 = vmatprep.subr.mxu0 0.0
        %236 = vmatpush1.msra.mxu0 0.0
        %237 = vmatprep.subr.mxu0 0.0
        %238 = vmatpush1.msra.mxu0 0.0
        %239 = vmatprep.subr.mxu0 0.0
        %240 = vmatpush1.msra.mxu0 0.0
        %241 = vmatprep.subr.mxu0 0.0
        %242 = vmatpush1.msra.mxu0 0.0
        %243 = vmatprep.subr.mxu0 0.0
        %244 = vmatpush1.msra.mxu0 0.0
        %245 = vmatprep.subr.mxu0 0.0
        %246 = vmatpush1.msra.mxu0 0.0
        %247 = vmatprep.subr.mxu0 0.0
        %248 = vmatpush1.msra.mxu0 0.0
        %249 = vmatprep.subr.mxu0 0.0
        %250 = vmatpush1.msra.mxu0 0.0
        %251 = vmatprep.subr.mxu0 0.0
        %252 = vmatpush1.msra.mxu0 0.0
        %253 = vmatprep.subr.mxu0 0.0
        %254 = vmatpush1.msra.mxu0 0.0
        %255 = vmatprep.subr.mxu0 0.0
        %256 = vmatpush1.msra.mxu0 0.0
        %257 = vmatprep.subr.mxu0 0.0
        %258 = vmatpush1.msra.mxu0 0.0
        %259 = vmatprep.subr.mxu0 0.0
        %260 = vmatpush1.msra.mxu0 %v205
        %261 = vmatprep.subr.mxu0 0.0
        %262 = vmatpush1.msra.mxu0 %v204
        %263 = vmatprep.subr.mxu0 0.0
        %264 = vmatpush2.msra.mxu0 0.0
        %265 = vmatprep.subr.mxu0 0.0
        %266 = vmatpush2.msra.mxu0 0.0
        %267 = vmatprep.subr.mxu0 0.0
        %268 = vmatpush2.msra.mxu0 0.0
        %269 = vmatprep.subr.mxu0 0.0
        %270 = vmatpush2.msra.mxu0 0.0
        %271 = vmatprep.subr.mxu0 0.0
        %272 = vmatpush2.msra.mxu0 0.0
        %273 = vmatprep.subr.mxu0 0.0
        %274 = vmatpush2.msra.mxu0 0.0
        %275 = vmatprep.subr.mxu0 0.0
        %276 = vmatpush2.msra.mxu0 0.0
        %277 = vmatprep.subr.mxu0 0.0
        %278 = vmatpush2.msra.mxu0 0.0
        %279 = vmatprep.subr.mxu0 0.0
        %280 = vmatpush2.msra.mxu0 0.0
        %281 = vmatprep.subr.mxu0 0.0
        %282 = vmatpush2.msra.mxu0 0.0
        %283 = vmatprep.subr.mxu0 0.0
        %284 = vmatpush2.msra.mxu0 0.0
        %285 = vmatprep.subr.mxu0 0.0
        %286 = vmatpush2.msra.mxu0 0.0
        %287 = vmatprep.subr.mxu0 0.0
        %288 = vmatpush2.msra.mxu0 0.0
        %289 = vmatprep.subr.mxu0 0.0
        %290 = vmatpush2.msra.mxu0 0.0
        %291 = vmatprep.subr.mxu0 0.0
        %292 = vmatpush2.msra.mxu0 0.0
        %293 = vmatprep.subr.mxu0 0.0
        %294 = vmatpush2.msra.mxu0 0.0
        %295 = vmatprep.mubr.f32.mxu0 0.0
        %296 = vmatmul.mubr.f32.gmra.mxu0 %v208
        %v297 = vpop.f32.mrf.mxu0
        %v298 = vadd.f32 0.0, %v297
        %v299 = vpop.f32.mrf.mxu0
        %300 = vmatprep.mubr.f32.mxu0 0.0
        %301 = vmatmul.mubr.f32.gmra.mxu0 %v211
        %v302 = vpop.f32.mrf.mxu0
        %v303 = vadd.f32 0.0, %v302
        %v304 = vpop.f32.mrf.mxu0
        %305 = vmatprep.mubr.f32.mxu0 0.0
        %306 = vmatmul.mubr.f32.gmra.mxu0 %v214
        %v307 = vpop.f32.mrf.mxu0
        %v308 = vadd.f32 0.0, %v307
        %v309 = vpop.f32.mrf.mxu0
        %310 = vmatprep.mubr.f32.mxu0 0.0
        %311 = vmatmul.mubr.f32.gmra.mxu0 %v217
        %v312 = vpop.f32.mrf.mxu0
        %v313 = vadd.f32 0.0, %v312
        %v314 = vpop.f32.mrf.mxu0
        %315 = vmatprep.mubr.f32.mxu0 0.0
        %316 = vmatmul.mubr.f32.gmra.mxu0 %v220
        %v317 = vpop.f32.mrf.mxu0
        %v318 = vadd.f32 0.0, %v317
        %v319 = vpop.f32.mrf.mxu0
        %320 = vmatprep.mubr.f32.mxu0 0.0
        %321 = vmatmul.mubr.f32.gmra.mxu0 %v223
        %v322 = vpop.f32.mrf.mxu0
        %v323 = vadd.f32 0.0, %v322
        %v324 = vpop.f32.mrf.mxu0
        %325 = vmatprep.mubr.f32.mxu0 0.0
        %326 = vmatmul.mubr.f32.gmra.mxu0 %v226
        %v327 = vpop.f32.mrf.mxu0
        %v328 = vadd.f32 0.0, %v327
        %v329 = vpop.f32.mrf.mxu0
        %330 = vmatprep.mubr.f32.mxu0 0.0
        %331 = vmatmul.mubr.f32.gmra.mxu0 %v229
        %v332 = vpop.f32.mrf.mxu0
        %v333 = vadd.f32 0.0, %v332
        %v334 = vpop.f32.mrf.mxu0
        %335 = vdwg.mxu0
        %v337 = vsel %vm206, %v200, 0
        %v340 = vsel %vm206, %v201, 0
        %v343 = vsel %vm206, %v202, 0
        %v346 = vsel %vm206, %v203, 0
        %348 = vmatprep.subr.mxu0 0.0
        %349 = vmatpush1.msra.mxu0 0.0
        %350 = vmatprep.subr.mxu0 0.0
        %351 = vmatpush1.msra.mxu0 0.0
        %352 = vmatprep.subr.mxu0 0.0
        %353 = vmatpush1.msra.mxu0 0.0
        %354 = vmatprep.subr.mxu0 0.0
        %355 = vmatpush1.msra.mxu0 0.0
        %356 = vmatprep.subr.mxu0 0.0
        %357 = vmatpush1.msra.mxu0 0.0
        %358 = vmatprep.subr.mxu0 0.0
        %359 = vmatpush1.msra.mxu0 0.0
        %360 = vmatprep.subr.mxu0 0.0
        %361 = vmatpush1.msra.mxu0 0.0
        %362 = vmatprep.subr.mxu0 0.0
        %363 = vmatpush1.msra.mxu0 0.0
        %364 = vmatprep.subr.mxu0 0.0
        %365 = vmatpush1.msra.mxu0 0.0
        %366 = vmatprep.subr.mxu0 0.0
        %367 = vmatpush1.msra.mxu0 0.0
        %368 = vmatprep.subr.mxu0 0.0
        %369 = vmatpush1.msra.mxu0 0.0
        %370 = vmatprep.subr.mxu0 0.0
        %371 = vmatpush1.msra.mxu0 0.0
        %372 = vmatprep.subr.mxu0 0.0
        %373 = vmatpush1.msra.mxu0 0.0
        %374 = vmatprep.subr.mxu0 0.0
        %375 = vmatpush1.msra.mxu0 0.0
        %376 = vmatprep.subr.mxu0 0.0
        %377 = vmatpush1.msra.mxu0 %v303
        %378 = vmatprep.subr.mxu0 0.0
        %379 = vmatpush1.msra.mxu0 %v298
        %380 = vmatprep.subr.mxu0 0.0
        %381 = vmatpush2.msra.mxu0 0.0
        %382 = vmatprep.subr.mxu0 0.0
        %383 = vmatpush2.msra.mxu0 0.0
        %384 = vmatprep.subr.mxu0 0.0
        %385 = vmatpush2.msra.mxu0 0.0
        %386 = vmatprep.subr.mxu0 0.0
        %387 = vmatpush2.msra.mxu0 0.0
        %388 = vmatprep.subr.mxu0 0.0
        %389 = vmatpush2.msra.mxu0 0.0
        %390 = vmatprep.subr.mxu0 0.0
        %391 = vmatpush2.msra.mxu0 0.0
        %392 = vmatprep.subr.mxu0 0.0
        %393 = vmatpush2.msra.mxu0 0.0
        %394 = vmatprep.subr.mxu0 0.0
        %395 = vmatpush2.msra.mxu0 0.0
        %396 = vmatprep.subr.mxu0 0.0
        %397 = vmatpush2.msra.mxu0 0.0
        %398 = vmatprep.subr.mxu0 0.0
        %399 = vmatpush2.msra.mxu0 0.0
        %400 = vmatprep.subr.mxu0 0.0
        %401 = vmatpush2.msra.mxu0 0.0
        %402 = vmatprep.subr.mxu0 0.0
        %403 = vmatpush2.msra.mxu0 0.0
        %404 = vmatprep.subr.mxu0 0.0
        %405 = vmatpush2.msra.mxu0 0.0
        %406 = vmatprep.subr.mxu0 0.0
        %407 = vmatpush2.msra.mxu0 0.0
        %408 = vmatprep.subr.mxu0 0.0
        %409 = vmatpush2.msra.mxu0 0.0
        %410 = vmatprep.subr.mxu0 0.0
        %411 = vmatpush2.msra.mxu0 0.0
        %412 = vmatprep.mubr.f32.mxu0 0.0
        %413 = vmatmul.mubr.f32.gmra.mxu0 %v337
        %v414 = vpop.f32.mrf.mxu0
        %v415 = vadd.f32 0.0, %v414
        %v416 = vpop.f32.mrf.mxu0
        %417 = vmatprep.mubr.f32.mxu0 0.0
        %418 = vmatmul.mubr.f32.gmra.mxu0 %v340
        %v419 = vpop.f32.mrf.mxu0
        %v420 = vadd.f32 0.0, %v419
        %v421 = vpop.f32.mrf.mxu0
        %422 = vmatprep.mubr.f32.mxu0 0.0
        %423 = vmatmul.mubr.f32.gmra.mxu0 %v343
        %v424 = vpop.f32.mrf.mxu0
        %v425 = vadd.f32 0.0, %v424
        %v426 = vpop.f32.mrf.mxu0
        %427 = vmatprep.mubr.f32.mxu0 0.0
        %428 = vmatmul.mubr.f32.gmra.mxu0 %v346
        %v429 = vpop.f32.mrf.mxu0
        %v430 = vadd.f32 0.0, %v429
        %v431 = vpop.f32.mrf.mxu0
        %432 = vdwg.mxu0
        %vm433 = vcmask 261120
        %434 = vst.msk [vmem:[%s189] sm:$0xff] %vm433, %v415
        %435 = vst.msk [vmem:[%s189 + $0x8] sm:$0xff] %vm433, %v420
        %436 = vst.msk [vmem:[%s189 + $0x10] sm:$0xff] %vm433, %v425
        %437 = vst.msk [vmem:[%s189 + $0x18] sm:$0xff] %vm433, %v430
        %438 = vmatprep.subr.mxu0 0.0
        %439 = vmatpush1.msra.mxu0 0.0
        %440 = vmatprep.subr.mxu0 0.0
        %441 = vmatpush1.msra.mxu0 0.0
        %442 = vmatprep.subr.mxu0 0.0
        %443 = vmatpush1.msra.mxu0 0.0
        %444 = vmatprep.subr.mxu0 0.0
        %445 = vmatpush1.msra.mxu0 0.0
        %446 = vmatprep.subr.mxu0 0.0
        %447 = vmatpush1.msra.mxu0 0.0
        %448 = vmatprep.subr.mxu0 0.0
        %449 = vmatpush1.msra.mxu0 0.0
        %450 = vmatprep.subr.mxu0 0.0
        %451 = vmatpush1.msra.mxu0 0.0
        %452 = vmatprep.subr.mxu0 0.0
        %453 = vmatpush1.msra.mxu0 0.0
        %454 = vmatprep.subr.mxu0 0.0
        %455 = vmatpush1.msra.mxu0 0.0
        %456 = vmatprep.subr.mxu0 0.0
        %457 = vmatpush1.msra.mxu0 0.0
        %458 = vmatprep.subr.mxu0 0.0
        %459 = vmatpush1.msra.mxu0 0.0
        %460 = vmatprep.subr.mxu0 0.0
        %461 = vmatpush1.msra.mxu0 0.0
        %462 = vmatprep.subr.mxu0 0.0
        %463 = vmatpush1.msra.mxu0 0.0
        %464 = vmatprep.subr.mxu0 0.0
        %465 = vmatpush1.msra.mxu0 0.0
        %466 = vmatprep.subr.mxu0 0.0
        %467 = vmatpush1.msra.mxu0 %v313
        %468 = vmatprep.subr.mxu0 0.0
        %469 = vmatpush1.msra.mxu0 %v308
        %470 = vmatprep.subr.mxu0 0.0
        %471 = vmatpush2.msra.mxu0 0.0
        %472 = vmatprep.subr.mxu0 0.0
        %473 = vmatpush2.msra.mxu0 0.0
        %474 = vmatprep.subr.mxu0 0.0
        %475 = vmatpush2.msra.mxu0 0.0
        %476 = vmatprep.subr.mxu0 0.0
        %477 = vmatpush2.msra.mxu0 0.0
        %478 = vmatprep.subr.mxu0 0.0
        %479 = vmatpush2.msra.mxu0 0.0
        %480 = vmatprep.subr.mxu0 0.0
        %481 = vmatpush2.msra.mxu0 0.0
        %482 = vmatprep.subr.mxu0 0.0
        %483 = vmatpush2.msra.mxu0 0.0
        %484 = vmatprep.subr.mxu0 0.0
        %485 = vmatpush2.msra.mxu0 0.0
        %486 = vmatprep.subr.mxu0 0.0
        %487 = vmatpush2.msra.mxu0 0.0
        %488 = vmatprep.subr.mxu0 0.0
        %489 = vmatpush2.msra.mxu0 0.0
        %490 = vmatprep.subr.mxu0 0.0
        %491 = vmatpush2.msra.mxu0 0.0
        %492 = vmatprep.subr.mxu0 0.0
        %493 = vmatpush2.msra.mxu0 0.0
        %494 = vmatprep.subr.mxu0 0.0
        %495 = vmatpush2.msra.mxu0 0.0
        %496 = vmatprep.subr.mxu0 0.0
        %497 = vmatpush2.msra.mxu0 0.0
        %498 = vmatprep.subr.mxu0 0.0
        %499 = vmatpush2.msra.mxu0 0.0
        %500 = vmatprep.subr.mxu0 0.0
        %501 = vmatpush2.msra.mxu0 0.0
        %502 = vmatprep.mubr.f32.mxu0 0.0
        %503 = vmatmul.mubr.f32.gmra.mxu0 %v337
        %v504 = vpop.f32.mrf.mxu0
        %v505 = vadd.f32 0.0, %v504
        %v506 = vpop.f32.mrf.mxu0
        %507 = vmatprep.mubr.f32.mxu0 0.0
        %508 = vmatmul.mubr.f32.gmra.mxu0 %v340
        %v509 = vpop.f32.mrf.mxu0
        %v510 = vadd.f32 0.0, %v509
        %v511 = vpop.f32.mrf.mxu0
        %512 = vmatprep.mubr.f32.mxu0 0.0
        %513 = vmatmul.mubr.f32.gmra.mxu0 %v343
        %v514 = vpop.f32.mrf.mxu0
        %v515 = vadd.f32 0.0, %v514
        %v516 = vpop.f32.mrf.mxu0
        %517 = vmatprep.mubr.f32.mxu0 0.0
        %518 = vmatmul.mubr.f32.gmra.mxu0 %v346
        %v519 = vpop.f32.mrf.mxu0
        %v520 = vadd.f32 0.0, %v519
        %v521 = vpop.f32.mrf.mxu0
        %522 = vdwg.mxu0
        %s523 = scalar_lea.vmem %s189, 32 [#allocation5]
        %524 = vst.msk [vmem:[%s523] sm:$0xff] %vm433, %v505
        %525 = vst.msk [vmem:[%s523 + $0x8] sm:$0xff] %vm433, %v510
        %526 = vst.msk [vmem:[%s523 + $0x10] sm:$0xff] %vm433, %v515
        %527 = vst.msk [vmem:[%s523 + $0x18] sm:$0xff] %vm433, %v520
        %528 = vmatprep.subr.mxu0 0.0
        %529 = vmatpush1.msra.mxu0 0.0
        %530 = vmatprep.subr.mxu0 0.0
        %531 = vmatpush1.msra.mxu0 0.0
        %532 = vmatprep.subr.mxu0 0.0
        %533 = vmatpush1.msra.mxu0 0.0
        %534 = vmatprep.subr.mxu0 0.0
        %535 = vmatpush1.msra.mxu0 0.0
        %536 = vmatprep.subr.mxu0 0.0
        %537 = vmatpush1.msra.mxu0 0.0
        %538 = vmatprep.subr.mxu0 0.0
        %539 = vmatpush1.msra.mxu0 0.0
        %540 = vmatprep.subr.mxu0 0.0
        %541 = vmatpush1.msra.mxu0 0.0
        %542 = vmatprep.subr.mxu0 0.0
        %543 = vmatpush1.msra.mxu0 0.0
        %544 = vmatprep.subr.mxu0 0.0
        %545 = vmatpush1.msra.mxu0 0.0
        %546 = vmatprep.subr.mxu0 0.0
        %547 = vmatpush1.msra.mxu0 0.0
        %548 = vmatprep.subr.mxu0 0.0
        %549 = vmatpush1.msra.mxu0 0.0
        %550 = vmatprep.subr.mxu0 0.0
        %551 = vmatpush1.msra.mxu0 0.0
        %552 = vmatprep.subr.mxu0 0.0
        %553 = vmatpush1.msra.mxu0 0.0
        %554 = vmatprep.subr.mxu0 0.0
        %555 = vmatpush1.msra.mxu0 0.0
        %556 = vmatprep.subr.mxu0 0.0
        %557 = vmatpush1.msra.mxu0 %v323
        %558 = vmatprep.subr.mxu0 0.0
        %559 = vmatpush1.msra.mxu0 %v318
        %560 = vmatprep.subr.mxu0 0.0
        %561 = vmatpush2.msra.mxu0 0.0
        %562 = vmatprep.subr.mxu0 0.0
        %563 = vmatpush2.msra.mxu0 0.0
        %564 = vmatprep.subr.mxu0 0.0
        %565 = vmatpush2.msra.mxu0 0.0
        %566 = vmatprep.subr.mxu0 0.0
        %567 = vmatpush2.msra.mxu0 0.0
        %568 = vmatprep.subr.mxu0 0.0
        %569 = vmatpush2.msra.mxu0 0.0
        %570 = vmatprep.subr.mxu0 0.0
        %571 = vmatpush2.msra.mxu0 0.0
        %572 = vmatprep.subr.mxu0 0.0
        %573 = vmatpush2.msra.mxu0 0.0
        %574 = vmatprep.subr.mxu0 0.0
        %575 = vmatpush2.msra.mxu0 0.0
        %576 = vmatprep.subr.mxu0 0.0
        %577 = vmatpush2.msra.mxu0 0.0
        %578 = vmatprep.subr.mxu0 0.0
        %579 = vmatpush2.msra.mxu0 0.0
        %580 = vmatprep.subr.mxu0 0.0
        %581 = vmatpush2.msra.mxu0 0.0
        %582 = vmatprep.subr.mxu0 0.0
        %583 = vmatpush2.msra.mxu0 0.0
        %584 = vmatprep.subr.mxu0 0.0
        %585 = vmatpush2.msra.mxu0 0.0
        %586 = vmatprep.subr.mxu0 0.0
        %587 = vmatpush2.msra.mxu0 0.0
        %588 = vmatprep.subr.mxu0 0.0
        %589 = vmatpush2.msra.mxu0 0.0
        %590 = vmatprep.subr.mxu0 0.0
        %591 = vmatpush2.msra.mxu0 0.0
        %592 = vmatprep.mubr.f32.mxu0 0.0
        %593 = vmatmul.mubr.f32.gmra.mxu0 %v337
        %v594 = vpop.f32.mrf.mxu0
        %v595 = vadd.f32 0.0, %v594
        %v596 = vpop.f32.mrf.mxu0
        %597 = vmatprep.mubr.f32.mxu0 0.0
        %598 = vmatmul.mubr.f32.gmra.mxu0 %v340
        %v599 = vpop.f32.mrf.mxu0
        %v600 = vadd.f32 0.0, %v599
        %v601 = vpop.f32.mrf.mxu0
        %602 = vmatprep.mubr.f32.mxu0 0.0
        %603 = vmatmul.mubr.f32.gmra.mxu0 %v343
        %v604 = vpop.f32.mrf.mxu0
        %v605 = vadd.f32 0.0, %v604
        %v606 = vpop.f32.mrf.mxu0
        %607 = vmatprep.mubr.f32.mxu0 0.0
        %608 = vmatmul.mubr.f32.gmra.mxu0 %v346
        %v609 = vpop.f32.mrf.mxu0
        %v610 = vadd.f32 0.0, %v609
        %v611 = vpop.f32.mrf.mxu0
        %612 = vdwg.mxu0
        %s613 = scalar_lea.vmem %s189, 64 [#allocation5]
        %614 = vst.msk [vmem:[%s613] sm:$0xff] %vm433, %v595
        %615 = vst.msk [vmem:[%s613 + $0x8] sm:$0xff] %vm433, %v600
        %616 = vst.msk [vmem:[%s613 + $0x10] sm:$0xff] %vm433, %v605
        %617 = vst.msk [vmem:[%s613 + $0x18] sm:$0xff] %vm433, %v610
        %618 = vmatprep.subr.mxu0 0.0
        %619 = vmatpush1.msra.mxu0 0.0
        %620 = vmatprep.subr.mxu0 0.0
        %621 = vmatpush1.msra.mxu0 0.0
        %622 = vmatprep.subr.mxu0 0.0
        %623 = vmatpush1.msra.mxu0 0.0
        %624 = vmatprep.subr.mxu0 0.0
        %625 = vmatpush1.msra.mxu0 0.0
        %626 = vmatprep.subr.mxu0 0.0
        %627 = vmatpush1.msra.mxu0 0.0
        %628 = vmatprep.subr.mxu0 0.0
        %629 = vmatpush1.msra.mxu0 0.0
        %630 = vmatprep.subr.mxu0 0.0
        %631 = vmatpush1.msra.mxu0 0.0
        %632 = vmatprep.subr.mxu0 0.0
        %633 = vmatpush1.msra.mxu0 0.0
        %634 = vmatprep.subr.mxu0 0.0
        %635 = vmatpush1.msra.mxu0 0.0
        %636 = vmatprep.subr.mxu0 0.0
        %637 = vmatpush1.msra.mxu0 0.0
        %638 = vmatprep.subr.mxu0 0.0
        %639 = vmatpush1.msra.mxu0 0.0
        %640 = vmatprep.subr.mxu0 0.0
        %641 = vmatpush1.msra.mxu0 0.0
        %642 = vmatprep.subr.mxu0 0.0
        %643 = vmatpush1.msra.mxu0 0.0
        %644 = vmatprep.subr.mxu0 0.0
        %645 = vmatpush1.msra.mxu0 0.0
        %646 = vmatprep.subr.mxu0 0.0
        %647 = vmatpush1.msra.mxu0 %v333
        %648 = vmatprep.subr.mxu0 0.0
        %649 = vmatpush1.msra.mxu0 %v328
        %650 = vmatprep.subr.mxu0 0.0
        %651 = vmatpush2.msra.mxu0 0.0
        %652 = vmatprep.subr.mxu0 0.0
        %653 = vmatpush2.msra.mxu0 0.0
        %654 = vmatprep.subr.mxu0 0.0
        %655 = vmatpush2.msra.mxu0 0.0
        %656 = vmatprep.subr.mxu0 0.0
        %657 = vmatpush2.msra.mxu0 0.0
        %658 = vmatprep.subr.mxu0 0.0
        %659 = vmatpush2.msra.mxu0 0.0
        %660 = vmatprep.subr.mxu0 0.0
        %661 = vmatpush2.msra.mxu0 0.0
        %662 = vmatprep.subr.mxu0 0.0
        %663 = vmatpush2.msra.mxu0 0.0
        %664 = vmatprep.subr.mxu0 0.0
        %665 = vmatpush2.msra.mxu0 0.0
        %666 = vmatprep.subr.mxu0 0.0
        %667 = vmatpush2.msra.mxu0 0.0
        %668 = vmatprep.subr.mxu0 0.0
        %669 = vmatpush2.msra.mxu0 0.0
        %670 = vmatprep.subr.mxu0 0.0
        %671 = vmatpush2.msra.mxu0 0.0
        %672 = vmatprep.subr.mxu0 0.0
        %673 = vmatpush2.msra.mxu0 0.0
        %674 = vmatprep.subr.mxu0 0.0
        %675 = vmatpush2.msra.mxu0 0.0
        %676 = vmatprep.subr.mxu0 0.0
        %677 = vmatpush2.msra.mxu0 0.0
        %678 = vmatprep.subr.mxu0 0.0
        %679 = vmatpush2.msra.mxu0 0.0
        %680 = vmatprep.subr.mxu0 0.0
        %681 = vmatpush2.msra.mxu0 0.0
        %682 = vmatprep.mubr.f32.mxu0 0.0
        %683 = vmatmul.mubr.f32.gmra.mxu0 %v337
        %v684 = vpop.f32.mrf.mxu0
        %v685 = vadd.f32 0.0, %v684
        %v686 = vpop.f32.mrf.mxu0
        %687 = vmatprep.mubr.f32.mxu0 0.0
        %688 = vmatmul.mubr.f32.gmra.mxu0 %v340
        %v689 = vpop.f32.mrf.mxu0
        %v690 = vadd.f32 0.0, %v689
        %v691 = vpop.f32.mrf.mxu0
        %692 = vmatprep.mubr.f32.mxu0 0.0
        %693 = vmatmul.mubr.f32.gmra.mxu0 %v343
        %v694 = vpop.f32.mrf.mxu0
        %v695 = vadd.f32 0.0, %v694
        %v696 = vpop.f32.mrf.mxu0
        %697 = vmatprep.mubr.f32.mxu0 0.0
        %698 = vmatmul.mubr.f32.gmra.mxu0 %v346
        %v699 = vpop.f32.mrf.mxu0
        %v700 = vadd.f32 0.0, %v699
        %v701 = vpop.f32.mrf.mxu0
        %702 = vdwg.mxu0
        %s703 = scalar_lea.vmem %s189, 96 [#allocation5]
        %704 = vst.msk [vmem:[%s703] sm:$0xff] %vm433, %v685
        %705 = vst.msk [vmem:[%s703 + $0x8] sm:$0xff] %vm433, %v690
        %706 = vst.msk [vmem:[%s703 + $0x10] sm:$0xff] %vm433, %v695
        %707 = vst.msk [vmem:[%s703 + $0x18] sm:$0xff] %vm433, %v700
        %s708 = sand.u32 %s96, 1
        %s709 = scalar_lea.sflag [#allocation4], %s708
        %s710 = sand.u32 %s96, 1
        %s711 = smul.addr %s710, 128
        %s712 = scalar_lea.vmem [#allocation5], %s711
        // Predicated region
        $region37: #{tpu_custom_call.1} parent=31 // pred_check
          %p713 = pneg %p106
        $region38: #{tpu_custom_call.1} parent=31 // pred_check_branch
          %715 = sbr.rel (%p713) target = $region40
        $region39: #{tpu_custom_call.1} parent=31 // pred_region
          %s716 = smul.u32 4, %s20
          %s718 = ssub.s32 2048, 2048
          %719 = vsyncadd %s709, %s718
          %s720 = smul.addr %s716, 4
          %s721 = smul.addr %s720, 128
          %s722 = scalar_lea.hbm %s3, %s721
          %s723 = sshll.u32 %s712, 4
          %s724 = int_to_ptr.vmem [resolvable:$true] %s723
          %729 = dma.vmem_to_hbm [thread:$0]  %s724, 2048, %s722, %s709, 128, 128, 8
        $region40: #{tpu_custom_call.1} parent=31 // pred_fallthru
          _
      $region32: #{tpu_custom_call.1} parent=5 // pred_fallthru
        _
      %p730 = scmp.le.s32.totalorder 2, %s15
      // Predicated region
      $region41: #{tpu_custom_call.1} parent=5 // pred_check
        %p731 = pneg %p730
      $region42: #{tpu_custom_call.1} parent=5 // pred_check_branch
        %733 = sbr.rel (%p731) target = $region44
      $region43: #{tpu_custom_call.1} parent=5 // pred_region
        %s734 = ssub.s32 %s15, 2
        // Predicated region
        $region45: #{tpu_custom_call.1} parent=43 // pred_check
          %p735 = pneg %p112
        $region46: #{tpu_custom_call.1} parent=43 // pred_check_branch
          %737 = sbr.rel (%p735) target = $region48
        $region47: #{tpu_custom_call.1} parent=43 // pred_region
          %s738 = sand.u32 %s97, 1
          %s739 = scalar_lea.sflag [#allocation4], %s738
          %s740 = sand.u32 %s97, 1
          %s741 = smul.addr %s740, 128
          %s742 = scalar_lea.vmem [#allocation5], %s741
          %743 = dma.done %s739, 2048
        $region48: #{tpu_custom_call.1} parent=43 // pred_fallthru
          _
      $region44: #{tpu_custom_call.1} parent=5 // pred_fallthru
        _
    $region6: #{tpu_custom_call.1} parent=1 // loop_footer
      %s19 = sadd.s32 1, %s15
    $region7: #{tpu_custom_call.1} parent=1 // loop_footer_branch
      %14 = sbr.rel target = $region3
    $region8: #{tpu_custom_call.1} parent=1 // loop_exit
      _
    %744 = vsyncpa [#allocation3], 1
    %s745 = scalar_lea.sflag [#allocation3], 1
    %746 = vsyncpa %s745, 1
    %747 = vsyncpa [#allocation4], 1
    %s748 = scalar_lea.sflag [#allocation4], 1
    %749 = vsyncpa %s748, 1

</llo_original>
